<compile_context>
chip_gen: v5e
topology: v5e:2x2
jax: 0.10.0
libtpu: 0.0.40
codegen_flags: <defaults>
</compile_context>

<pallas_src>
import jax
import jax.numpy as jnp
from jax.experimental import pallas as pl
from jax.experimental.pallas import tpu as pltpu


_TILE_N = 1024  # rows per tile: multiple of 8 (sublane) and 128 (output lane)


def _split_columns_kernel(x_ref, o_ref):
    # x_ref: (tn, M) tile of the flattened input.
    # o_ref: (M, tn) tile of the output slab (row i == model i's column).
    # One XLU transpose per tile; the kernel is HBM-bandwidth bound, so the
    # XLU slot never binds (3 XLUs on v5e, 2 on v6e/v7x).
    o_ref[...] = x_ref[...].T


def aggregator_attention_logger(x, model_ids, *, tile_n=_TILE_N):
    """JAX/Pallas equivalent of AggregatorAttentionLogger.forward."""
    m = len(model_ids)
    # Same implicit contract as torch .view(-1, M): numel divisible by M.
    x_flat = x.reshape(-1, m)
    n = x_flat.shape[0]
    itemsize = jnp.dtype(x_flat.dtype).itemsize

    if n <= tile_n:
        # Small input: single full-array block (block dims == array dims, so
        # the (8,128) divisibility rule does not apply).
        tn, n_pad = n, n
    else:
        tn = tile_n
        n_pad = pl.cdiv(n, tn) * tn
        if n_pad != n:
            # Pad the ragged tail so every grid step reads/writes a full,
            # aligned tile; pad columns are dropped below.
            x_flat = jnp.pad(x_flat, ((0, n_pad - n), (0, 0)))

    out = pl.pallas_call(
        _split_columns_kernel,
        out_shape=jax.ShapeDtypeStruct((m, n_pad), x_flat.dtype),
        grid=(n_pad // tn,),
        in_specs=[pl.BlockSpec((tn, m), lambda i: (i, 0))],
        out_specs=pl.BlockSpec((m, tn), lambda i: (0, i)),
        compiler_params=pltpu.CompilerParams(
            dimension_semantics=("parallel",)),
        cost_estimate=pl.CostEstimate(
            flops=0,
            transcendentals=0,
            bytes_accessed=2 * n_pad * m * itemsize),
    )(x_flat)

    if n_pad != n:
        out = out[:, :n]

    # Split the (M, N) slab once and zip with the model ids (avoids M separate
    # gather dispatches around the kernel).
    return dict(zip(model_ids, tuple(out)))


def _reference(x, model_ids):
    # Pure-JAX reference mirroring the PyTorch forward exactly.
    x_flat = x.reshape(-1, len(model_ids))
    return {mid: x_flat[:, i] for i, mid in enumerate(model_ids)}


def _check(x, model_ids):
    out = aggregator_attention_logger(x, model_ids)
    out = {k: jax.block_until_ready(v) for k, v in out.items()}
    ref = _reference(x, model_ids)
    for mid in model_ids:
        assert out[mid].shape == ref[mid].shape, (mid, out[mid].shape, ref[mid].shape)
        assert jnp.array_equal(out[mid], ref[mid]), mid


if __name__ == "__main__":
    model_ids = ["model_a", "model_b", "model_c", "model_d"]
    m = len(model_ids)
    key = jax.random.PRNGKey(0)
    k1, k2 = jax.random.split(key)

    # Small shape consistent with the forward: (batch, seq, num_models).
    x_small = jax.random.uniform(k1, (2, 8, m), dtype=jnp.float32)
    _check(x_small, model_ids)

    # Shape that exercises the tiled grid + ragged-tail padding path
    # (N = 4*700 = 2800 -> 1024-row tiles, padded to 3072, grid=(3,)).
    x_tiled = jax.random.uniform(k2, (4, 700, m), dtype=jnp.float32)
    _check(x_tiled, model_ids)

    print("KERNEL_OK")
</pallas_src>

<mosaic_0001>
module attributes {stable_mosaic.version = 11 : i64} {
  func.func @_split_columns_kernel(%arg0: i32, %arg1: memref<16x4xf32, #tpu.memory_space<vmem>>, %arg2: memref<4x16xf32, #tpu.memory_space<vmem>>) attributes {dimension_semantics = [#tpu.dimension_semantics<parallel>], iteration_bounds = array<i64: 1>, scalar_prefetch = 0 : i64, scratch_operands = 0 : i64, tpu.core_type = #tpu.core_type<tc>, window_params = [{transform_indices = @transform_0, window_bounds = array<i64: 16, 4>}, {transform_indices = @transform_1, window_bounds = array<i64: 4, 16>}]} {
    %c0 = arith.constant 0 : index
    %c0_0 = arith.constant 0 : index
    %0 = vector.load %arg1[%c0, %c0_0] : memref<16x4xf32, #tpu.memory_space<vmem>>, vector<16x4xf32>
    %1 = tpu.transpose %0, [1, 0] : vector<16x4xf32> -> vector<4x16xf32>
    %c0_1 = arith.constant 0 : index
    %c0_2 = arith.constant 0 : index
    %2 = vector.load %arg2[%c0_1, %c0_2] : memref<4x16xf32, #tpu.memory_space<vmem>>, vector<4x16xf32>
    tpu.vector_store %arg2[%c0_1, %c0_2], %1 {strides = array<i32>} : memref<4x16xf32, #tpu.memory_space<vmem>>, vector<4x16xf32>,
    return
  }
  func.func @transform_0(%arg0: i32) -> (i32, i32) {
    %c0_i32 = arith.constant 0 : i32
    %c0_i32_0 = arith.constant 0 : i32
    return %arg0, %c0_i32 : i32, i32
  }
  func.func @transform_1(%arg0: i32) -> (i32, i32) {
    %c0_i32 = arith.constant 0 : i32
    %c0_i32_0 = arith.constant 0 : i32
    return %c0_i32, %arg0 : i32, i32
  }
}

</mosaic_0001>

<llo_original>
// kernel: tpu_custom_call.1
$region0: #{tpu_custom_call.1}
  #allocation0 [shape = 'u32[]', space=smem, size = 0x4, offset = 0x4, fixed_abs, tag = 'smem constant byte address 0x4 - core index']
  #allocation1 [shape = 'u32[72,128]{1,0:T(1,128)}', space=vmem, size = 0x9000, scoped, tag = 'internal scratch']
  %s0 = inlined_call_operand.vmem [shape: f32[16,4], index: 0, kind: input, shape index: {}]
  %s1 = inlined_call_operand.hbm [shape: f32[4,16], index: 1, kind: output, shape index: {}]
  %s2 = sld [smem:[#allocation0]]
  $region14: #{tpu_custom_call.1} parent=0
    _
  %s4 = ssub.s32 1, %s2
  %s5 = scalar_select 0, %s4, %s2
  $region1: #{tpu_custom_call.1} parent=0
    #allocation2 [shape = 'u8[2048]{0}', space=vmem, size = 0x800, scoped, tag = 'output window, operand 0, single buffered']
    #allocation3 [shape = 's32[1]{0}', space=sflag, size = 0x4, scoped, tag = 'scoped memory for tpu_custom_call.1']
    %6 = vsyncpa [#allocation3], 0
    // Predicated region
    $region2: #{tpu_custom_call.1} parent=1 // pred_check
      _
    $region3: #{tpu_custom_call.1} parent=1 // pred_check_branch
      %8 = sbr.rel (0) target = $region5
    $region4: #{tpu_custom_call.1} parent=1 // pred_region
      _
    $region5: #{tpu_custom_call.1} parent=1 // pred_fallthru
      _
    %v9 = vld [vmem:[%s0] sm:$0xff]
    %v10 = vld [vmem:[%s0 + $0x8] sm:$0xff]
    %11 = vxpose.xlu0.b32.start [1/16] %v9, 128
    %12 = vxpose.xlu0.b32.cont [2/16] %v10, 128
    %13 = vxpose.xlu0.b32.cont [3/16] 0.0, 128
    %14 = vxpose.xlu0.b32.cont [4/16] 0.0, 128
    %15 = vxpose.xlu0.b32.cont [5/16] 0.0, 128
    %16 = vxpose.xlu0.b32.cont [6/16] 0.0, 128
    %17 = vxpose.xlu0.b32.cont [7/16] 0.0, 128
    %18 = vxpose.xlu0.b32.cont [8/16] 0.0, 128
    %19 = vxpose.xlu0.b32.cont [9/16] 0.0, 128
    %20 = vxpose.xlu0.b32.cont [10/16] 0.0, 128
    %21 = vxpose.xlu0.b32.cont [11/16] 0.0, 128
    %22 = vxpose.xlu0.b32.cont [12/16] 0.0, 128
    %23 = vxpose.xlu0.b32.cont [13/16] 0.0, 128
    %24 = vxpose.xlu0.b32.cont [14/16] 0.0, 128
    %25 = vxpose.xlu0.b32.cont [15/16] 0.0, 128
    %26 = vxpose.xlu0.b32.end [16/16] 0.0, 128
    %v27 = vpop.trf.xlu0
    %v28 = vpop.trf.xlu0
    %v29 = vpop.trf.xlu0
    %v30 = vpop.trf.xlu0
    %v31 = vpop.trf.xlu0
    %v32 = vpop.trf.xlu0
    %v33 = vpop.trf.xlu0
    %v34 = vpop.trf.xlu0
    %v35 = vpop.trf.xlu0
    %v36 = vpop.trf.xlu0
    %v37 = vpop.trf.xlu0
    %v38 = vpop.trf.xlu0
    %v39 = vpop.trf.xlu0
    %v40 = vpop.trf.xlu0
    %v41 = vpop.trf.xlu0
    %v42 = vpop.trf.xlu0
    %vm43 = vcmask 125952
    %44 = vst.msk [vmem:[#allocation2] sm:$0xf] %vm43, %v27
    // Predicated region
    $region6: #{tpu_custom_call.1} parent=1 // pred_check
      _
    $region7: #{tpu_custom_call.1} parent=1 // pred_check_branch
      %46 = sbr.rel (0) target = $region9
    $region8: #{tpu_custom_call.1} parent=1 // pred_region
      %48 = vsyncadd [#allocation3], 0
      %s50 = sshll.u32 [#allocation2], 4
      %s51 = int_to_ptr.vmem [resolvable:$true] %s50
      %s52 = sshll.u32 %s1, 4
      %s53 = int_to_ptr.hbm [resolvable:$true] %s52
      %55 = dma.vmem_to_hbm [thread:$0]  %s51, 64, %s53, [#allocation3]
    $region9: #{tpu_custom_call.1} parent=1 // pred_fallthru
      _
    // Predicated region
    $region10: #{tpu_custom_call.1} parent=1 // pred_check
      _
    $region11: #{tpu_custom_call.1} parent=1 // pred_check_branch
      %57 = sbr.rel (0) target = $region13
    $region12: #{tpu_custom_call.1} parent=1 // pred_region
      %59 = dma.done [#allocation3], 64
    $region13: #{tpu_custom_call.1} parent=1 // pred_fallthru
      _
    %60 = vsyncpa [#allocation3], 1

</llo_original>
